<compile_context>
chip_gen: v5e
topology: v5e:2x2
jax: 0.10.0
libtpu: 0.0.40
codegen_flags: <defaults>
</compile_context>

<pallas_src>
import jax
import jax.numpy as jnp
from jax.experimental import pallas as pl
from jax.experimental.pallas import tpu as pltpu

LANES = 128
MAX_TILE_ROWS = 2048   # (2048, 128) f32 = 1 MiB per block
MIN_BLOCKS = 4         # keep >= ~4 grid steps: 2 TCs on v7x + pipelined DMA


def _conv1x1_tanh_kernel(w_ref, b_ref, x_ref, o_ref):
    # w_ref, b_ref: (1, 1) scalars in SMEM (read on the free scalar slots)
    # x_ref, o_ref: (tile_rows, cols) tiles in VMEM
    w = w_ref[0, 0]
    b = b_ref[0, 0]
    # tanh goes to the EUP; the mul/add are free VPU filler alongside the DMA.
    o_ref[...] = jnp.tanh(x_ref[...] * w + b)


def _round_up(x, m):
    return (x + m - 1) // m * m


def _launch(x2d, w_s, b_s):
    rows, cols = x2d.shape

    if rows <= 8:
        # Full-extent block along rows (allowed for any size).
        tile_rows = rows
    else:
        # Big blocks, but keep at least ~MIN_BLOCKS grid steps. For rows > 8
        # this is always a multiple of 8 and <= rows, so the (8, 128) / full-
        # extent BlockSpec constraint is satisfied; the last block may be
        # partial (Pallas masks the boundary stores).
        tile_rows = min(MAX_TILE_ROWS, _round_up(pl.cdiv(rows, MIN_BLOCKS), 8))

    grid = (pl.cdiv(rows, tile_rows),)

    return pl.pallas_call(
        _conv1x1_tanh_kernel,
        out_shape=jax.ShapeDtypeStruct((rows, cols), x2d.dtype),
        grid_spec=pl.GridSpec(
            grid=grid,
            in_specs=[
                pl.BlockSpec(memory_space=pltpu.MemorySpace.SMEM),  # weight scalar
                pl.BlockSpec(memory_space=pltpu.MemorySpace.SMEM),  # bias scalar
                pl.BlockSpec((tile_rows, cols), lambda i: (i, 0)),  # input tile
            ],
            out_specs=pl.BlockSpec((tile_rows, cols), lambda i: (i, 0)),
        ),
        compiler_params=pltpu.CompilerParams(
            dimension_semantics=("parallel",)  # shards row-blocks across TCs
        ),
    )(w_s, b_s, x2d)


def conv1x1_tanh(x_nchw, weight, bias):
    """x_nchw: (N, 1, H, W) float32.  weight: (1,1,1,1).  bias: (1,)."""
    n, c, h, w = x_nchw.shape
    assert c == 1, "ModelTanh uses a 1-in / 1-out channel 1x1 conv"
    total = n * c * h * w

    w_s = weight.reshape(1, 1).astype(x_nchw.dtype)
    b_s = bias.reshape(1, 1).astype(x_nchw.dtype)

    if total % LANES == 0:
        # Lane-dense zero-copy view: every vreg lane used, unmasked stores.
        x2d = x_nchw.reshape(total // LANES, LANES)
    else:
        # Zero-copy view with the last dim full-extent; lane stores are masked
        # for W < 128, but there are no extra pad/slice HBM passes.
        x2d = x_nchw.reshape(n * c * h, w)

    out2d = _launch(x2d, w_s, b_s)
    return out2d.reshape(n, c, h, w)


def reference(x_nchw, weight, bias):
    # Pure-JAX reference of Conv2d(1,1,(1,1)) + tanh.
    return jnp.tanh(x_nchw * weight.reshape(()) + bias.reshape(()))


if __name__ == "__main__":
    key = jax.random.PRNGKey(0)
    kx, kw, kb, kx2 = jax.random.split(key, 4)

    # Small shapes consistent with the module: N=2, C=1 (required), H=W=16.
    x = jax.random.normal(kx, (2, 1, 16, 16), dtype=jnp.float32)
    weight = jax.random.normal(kw, (1, 1, 1, 1), dtype=jnp.float32)
    bias = jax.random.normal(kb, (1,), dtype=jnp.float32)

    out = jax.block_until_ready(conv1x1_tanh(x, weight, bias))
    ref = reference(x, weight, bias)
    assert out.shape == (2, 1, 16, 16)
    assert out.dtype == jnp.float32
    assert jnp.allclose(out, ref, atol=1e-6, rtol=1e-6), "mismatch vs reference"

    # Also exercise the module's original (non-multiple-of-128) shape
    # (4, 1, 100, 100): total=40000 -> (400, 100) full-extent-W path with a
    # partial boundary block.
    x_big = jax.random.normal(kx2, (4, 1, 100, 100), dtype=jnp.float32)
    out_big = jax.block_until_ready(conv1x1_tanh(x_big, weight, bias))
    ref_big = reference(x_big, weight, bias)
    assert out_big.shape == (4, 1, 100, 100)
    assert jnp.allclose(out_big, ref_big, atol=1e-6, rtol=1e-6), "mismatch (boundary path)"

    print("KERNEL_OK")
</pallas_src>

<mosaic_0001>
module attributes {stable_mosaic.version = 11 : i64} {
  func.func @_conv1x1_tanh_kernel(%arg0: i32, %arg1: memref<1x1xf32, #tpu.memory_space<smem>>, %arg2: memref<1x1xf32, #tpu.memory_space<smem>>, %arg3: memref<4x128xf32, #tpu.memory_space<vmem>>, %arg4: memref<4x128xf32, #tpu.memory_space<vmem>>) attributes {dimension_semantics = [#tpu.dimension_semantics<parallel>], iteration_bounds = array<i64: 1>, scalar_prefetch = 0 : i64, scratch_operands = 0 : i64, tpu.core_type = #tpu.core_type<tc>, window_params = [{transform_indices = @transform_0, window_bounds = array<i64: 1, 1>}, {transform_indices = @transform_1, window_bounds = array<i64: 1, 1>}, {transform_indices = @transform_2, window_bounds = array<i64: 4, 128>}, {transform_indices = @transform_3, window_bounds = array<i64: 4, 128>}]} {
    %c0 = arith.constant 0 : index
    %c0_0 = arith.constant 0 : index
    %0 = memref.load %arg1[%c0, %c0_0] : memref<1x1xf32, #tpu.memory_space<smem>>
    %c0_1 = arith.constant 0 : index
    %c0_2 = arith.constant 0 : index
    %1 = memref.load %arg2[%c0_1, %c0_2] : memref<1x1xf32, #tpu.memory_space<smem>>
    %c0_3 = arith.constant 0 : index
    %c0_4 = arith.constant 0 : index
    %2 = vector.load %arg3[%c0_3, %c0_4] : memref<4x128xf32, #tpu.memory_space<vmem>>, vector<4x128xf32>
    %3 = vector.broadcast %0 : f32 to vector<4x128xf32>
    %4 = arith.mulf %2, %3 : vector<4x128xf32>
    %5 = vector.broadcast %1 : f32 to vector<4x128xf32>
    %6 = arith.addf %4, %5 : vector<4x128xf32>
    %7 = math.tanh %6 : vector<4x128xf32>
    %c0_5 = arith.constant 0 : index
    %c0_6 = arith.constant 0 : index
    %8 = vector.load %arg4[%c0_5, %c0_6] : memref<4x128xf32, #tpu.memory_space<vmem>>, vector<4x128xf32>
    tpu.vector_store %arg4[%c0_5, %c0_6], %7 {strides = array<i32>} : memref<4x128xf32, #tpu.memory_space<vmem>>, vector<4x128xf32>,
    return
  }
  func.func @transform_0(%arg0: i32) -> (i32, i32) {
    %c0_i32 = arith.constant 0 : i32
    %c0_i32_0 = arith.constant 0 : i32
    %c0_i32_1 = arith.constant 0 : i32
    return %c0_i32, %c0_i32_0 : i32, i32
  }
  func.func @transform_1(%arg0: i32) -> (i32, i32) {
    %c0_i32 = arith.constant 0 : i32
    %c0_i32_0 = arith.constant 0 : i32
    %c0_i32_1 = arith.constant 0 : i32
    return %c0_i32, %c0_i32_0 : i32, i32
  }
  func.func @transform_2(%arg0: i32) -> (i32, i32) {
    %c0_i32 = arith.constant 0 : i32
    %c0_i32_0 = arith.constant 0 : i32
    return %arg0, %c0_i32 : i32, i32
  }
  func.func @transform_3(%arg0: i32) -> (i32, i32) {
    %c0_i32 = arith.constant 0 : i32
    %c0_i32_0 = arith.constant 0 : i32
    return %arg0, %c0_i32 : i32, i32
  }
}

</mosaic_0001>

<llo_original>
// kernel: tpu_custom_call.1
$region0: #{tpu_custom_call.1}
  #allocation0 [shape = 'u32[]', space=smem, size = 0x4, offset = 0x4, fixed_abs, tag = 'smem constant byte address 0x4 - core index']
  #allocation1 [shape = 'u32[72,128]{1,0:T(1,128)}', space=vmem, size = 0x9000, scoped, tag = 'internal scratch']
  #allocation2 [shape = 'f32[1,1]{1,0:T(1,128)S(6)}', space=smem, size = 0x200, scoped, tag = 'scoped memory for tpu_custom_call.1']
  #allocation3 [shape = 'f32[1,1]{1,0:T(1,128)S(6)}', space=smem, size = 0x200, scoped, tag = 'scoped memory for tpu_custom_call.1']
  %s0 = inlined_call_operand.<no memory space> [shape: f32[1,1], index: 0, kind: input, shape index: {}]
  %s1 = inlined_call_operand.<no memory space> [shape: f32[1,1], index: 1, kind: input, shape index: {}]
  %s2 = inlined_call_operand.vmem [shape: f32[4,128], index: 2, kind: input, shape index: {}]
  %s3 = inlined_call_operand.hbm [shape: f32[4,128], index: 3, kind: output, shape index: {}]
  %s4 = sld [smem:[#allocation0]]
  $region22: #{tpu_custom_call.1} parent=0
    _
  %s6 = ssub.s32 1, %s4
  %s7 = scalar_select 0, %s6, %s4
  %8 = sst [smem:[#allocation2]] %s0
  %9 = sst [smem:[#allocation3]] %s1
  $region1: #{tpu_custom_call.1} parent=0
    #allocation4 [shape = 'u8[2048]{0}', space=vmem, size = 0x800, scoped, tag = 'output window, operand 0, single buffered']
    #allocation5 [shape = 's32[1]{0}', space=sflag, size = 0x4, scoped, tag = 'scoped memory for tpu_custom_call.1']
    %10 = vsyncpa [#allocation5], 0
    // Predicated region
    $region2: #{tpu_custom_call.1} parent=1 // pred_check
      _
    $region3: #{tpu_custom_call.1} parent=1 // pred_check_branch
      %12 = sbr.rel (0) target = $region5
    $region4: #{tpu_custom_call.1} parent=1 // pred_region
      _
    $region5: #{tpu_custom_call.1} parent=1 // pred_fallthru
      _
    // Predicated region
    $region6: #{tpu_custom_call.1} parent=1 // pred_check
      _
    $region7: #{tpu_custom_call.1} parent=1 // pred_check_branch
      %14 = sbr.rel (0) target = $region9
    $region8: #{tpu_custom_call.1} parent=1 // pred_region
      _
    $region9: #{tpu_custom_call.1} parent=1 // pred_fallthru
      _
    // Predicated region
    $region10: #{tpu_custom_call.1} parent=1 // pred_check
      _
    $region11: #{tpu_custom_call.1} parent=1 // pred_check_branch
      %16 = sbr.rel (0) target = $region13
    $region12: #{tpu_custom_call.1} parent=1 // pred_region
      _
    $region13: #{tpu_custom_call.1} parent=1 // pred_fallthru
      _
    %s17 = sld [smem:[#allocation2]]
    %s18 = sld [smem:[#allocation3]]
    %v19 = vld [vmem:[%s2] sm:$0xf]
    %v20 = vstv %s17
    %v21 = vmul.f32 %v19, %v20
    %v22 = vstv %s18
    %v23 = vadd.f32 %v21, %v22
    %v24 = vtanh.pop %v23
    %25 = vst [vmem:[#allocation4] sm:$0xf] %v24
    // Predicated region
    $region14: #{tpu_custom_call.1} parent=1 // pred_check
      _
    $region15: #{tpu_custom_call.1} parent=1 // pred_check_branch
      %27 = sbr.rel (0) target = $region17
    $region16: #{tpu_custom_call.1} parent=1 // pred_region
      %29 = vsyncadd [#allocation5], 0
      %s31 = sshll.u32 [#allocation4], 4
      %s32 = int_to_ptr.vmem [resolvable:$true] %s31
      %s33 = sshll.u32 %s3, 4
      %s34 = int_to_ptr.hbm [resolvable:$true] %s33
      %36 = dma.vmem_to_hbm [thread:$0]  %s32, 64, %s34, [#allocation5]
    $region17: #{tpu_custom_call.1} parent=1 // pred_fallthru
      _
    // Predicated region
    $region18: #{tpu_custom_call.1} parent=1 // pred_check
      _
    $region19: #{tpu_custom_call.1} parent=1 // pred_check_branch
      %38 = sbr.rel (0) target = $region21
    $region20: #{tpu_custom_call.1} parent=1 // pred_region
      %40 = dma.done [#allocation5], 64
    $region21: #{tpu_custom_call.1} parent=1 // pred_fallthru
      _
    %41 = vsyncpa [#allocation5], 1

</llo_original>
